<compile_context>
chip_gen: v6e
topology: v6e:2x2x1
jax: 0.10.0
libtpu: 0.0.40
codegen_flags: <defaults>
</compile_context>

<pallas_src>
import math
import functools

import jax
import jax.numpy as jnp
from jax import lax
from jax.experimental import pallas as pl
from jax.experimental.pallas import tpu as pltpu


def _round_up(x, m):
    return ((x + m - 1) // m) * m


def _attention_kernel(q_ref, k_ref, v_ref, vl_ref, o_ref,
                      m_sc, l_sc, acc_sc, *, scale, nk):
    kv = pl.program_id(2)
    tk = k_ref.shape[1]

    @pl.when(kv == 0)
    def _():
        m_sc[...] = jnp.full(m_sc.shape, -jnp.inf, m_sc.dtype)
        l_sc[...] = jnp.zeros(l_sc.shape, l_sc.dtype)
        acc_sc[...] = jnp.zeros(acc_sc.shape, acc_sc.dtype)

    # bf16 MXU inputs, f32 accumulate. Scale folded into Q (Tq*D muls, not Tq*Tk).
    q = (q_ref[0] * scale).astype(jnp.bfloat16)          # (Tq, D)
    k = k_ref[0].astype(jnp.bfloat16)                    # (Tk, D)
    s = lax.dot_general(q, k, (((1,), (1,)), ((), ())),
                        preferred_element_type=jnp.float32)   # (Tq, Tk) f32

    # Masking: global key index = kv*Tk + col. Masked-but-real keys get the
    # reference's -1e6; padded keys (>= Nk) get -1e9 so they never contribute,
    # even when a whole row is masked (valid_len == 0).
    vl = vl_ref[0]                                                    # (Tq, 1) int32
    col = lax.broadcasted_iota(jnp.int32, (1, tk), 1) + kv * tk       # (1, Tk)
    s = jnp.where(col < vl, s, jnp.float32(-1e6))
    s = jnp.where(col < nk, s, jnp.float32(-1e9))

    # Online softmax update (all f32 on the VPU/EUP).
    m_prev = m_sc[...]
    m_new = jnp.maximum(m_prev, jnp.max(s, axis=-1, keepdims=True))
    alpha = jnp.exp(m_prev - m_new)                                   # (Tq, 1)
    p = jnp.exp(s - m_new)                                            # (Tq, Tk)
    l_sc[...] = alpha * l_sc[...] + jnp.sum(p, axis=-1, keepdims=True)
    acc_sc[...] = alpha * acc_sc[...] + jnp.dot(
        p.astype(jnp.bfloat16), v_ref[0].astype(jnp.bfloat16),
        preferred_element_type=jnp.float32)
    m_sc[...] = m_new

    @pl.when(kv == pl.num_programs(2) - 1)
    def _():
        # TODO(synk): nn.Dropout omitted — eval/inference forward (identity).
        out = acc_sc[...] * pl.reciprocal(l_sc[...], approx=False)
        o_ref[0] = out.astype(o_ref.dtype)


def dot_product_attention(queries, keys, values, valid_lens=None,
                          *, q_tile=128, kv_tile=512):
    """queries: (B, Nq, d), keys: (B, Nk, d), values: (B, Nk, v)."""
    B, Nq, D = queries.shape
    _, Nk, _ = keys.shape
    Dv = values.shape[-1]

    queries = queries.astype(jnp.float32)
    keys = keys.astype(jnp.float32)
    values = values.astype(jnp.float32)

    # Only the sequence dims are padded (to the tile), and only when needed.
    # Feature dims (D, Dv) use full-array-dim blocks -> no padded HBM copies.
    Tq = min(q_tile, _round_up(Nq, 8))       # v6e/v7x: q_tile=256 fills the MXU
    Nqp = _round_up(Nq, Tq)
    Tk = min(kv_tile, _round_up(Nk, 8))
    Nkp = _round_up(Nk, Tk)

    q = queries if Nqp == Nq else jnp.pad(queries, ((0, 0), (0, Nqp - Nq), (0, 0)))
    k = keys if Nkp == Nk else jnp.pad(keys, ((0, 0), (0, Nkp - Nk), (0, 0)))
    v = values if Nkp == Nk else jnp.pad(values, ((0, 0), (0, Nkp - Nk), (0, 0)))

    # Normalize valid_lens to per-(batch, query) int32 lengths (None -> Nk).
    if valid_lens is None:
        vl = jnp.full((B, Nq), Nk, jnp.int32)
    elif valid_lens.ndim == 1:
        vl = jnp.broadcast_to(valid_lens.astype(jnp.int32)[:, None], (B, Nq))
    else:
        vl = valid_lens.astype(jnp.int32)
    if Nqp != Nq:
        vl = jnp.pad(vl, ((0, 0), (0, Nqp - Nq)), constant_values=Nk)
    vl = vl.reshape(B, Nqp, 1)

    kernel = functools.partial(_attention_kernel,
                               scale=1.0 / math.sqrt(D), nk=Nk)
    grid = (B, Nqp // Tq, Nkp // Tk)

    out = pl.pallas_call(
        kernel,
        out_shape=jax.ShapeDtypeStruct((B, Nqp, Dv), jnp.float32),
        grid_spec=pltpu.PrefetchScalarGridSpec(
            num_scalar_prefetch=0,
            grid=grid,
            in_specs=[
                pl.BlockSpec((1, Tq, D), lambda b, qi, kv: (b, qi, 0)),   # Q tile
                pl.BlockSpec((1, Tk, D), lambda b, qi, kv: (b, kv, 0)),   # K tile
                pl.BlockSpec((1, Tk, Dv), lambda b, qi, kv: (b, kv, 0)),  # V tile
                pl.BlockSpec((1, Tq, 1), lambda b, qi, kv: (b, qi, 0)),   # valid lens
            ],
            out_specs=pl.BlockSpec((1, Tq, Dv), lambda b, qi, kv: (b, qi, 0)),
            scratch_shapes=[
                pltpu.VMEM((Tq, 1), jnp.float32),    # running max  m
                pltpu.VMEM((Tq, 1), jnp.float32),    # running sum  l
                pltpu.VMEM((Tq, Dv), jnp.float32),   # accumulator  acc
            ],
        ),
        compiler_params=pltpu.CompilerParams(
            dimension_semantics=("parallel", "parallel", "arbitrary")),
    )(q, k, v, vl)

    return out[:, :Nq, :]


def reference_forward(queries, keys, values, valid_lens=None):
    d = queries.shape[-1]
    scores = jnp.einsum('bqd,bkd->bqk', queries, keys) / math.sqrt(d)
    if valid_lens is not None:
        if valid_lens.ndim == 1:
            vl = jnp.broadcast_to(valid_lens[:, None], scores.shape[:2])
        else:
            vl = valid_lens
        mask = jnp.arange(scores.shape[-1])[None, None, :] < vl[:, :, None]
        scores = jnp.where(mask, scores, -1e6)
    attn = jax.nn.softmax(scores, axis=-1)
    return jnp.einsum('bqk,bkv->bqv', attn, values)


if __name__ == "__main__":
    B, Nq, Nk, D, Dv = 2, 8, 10, 16, 20

    key = jax.random.PRNGKey(0)
    kq, kk, kv = jax.random.split(key, 3)
    queries = jax.random.normal(kq, (B, Nq, D), jnp.float32)
    keys = jax.random.normal(kk, (B, Nk, D), jnp.float32)
    values = jax.random.normal(kv, (B, Nk, Dv), jnp.float32)
    valid_lens = jnp.array([3, 7], jnp.int32)

    # bf16 MXU inputs (f32 accumulate) -> compare at ~1e-2 tolerance.
    TOL = dict(atol=2e-2, rtol=2e-2)

    # masked path (1-D valid_lens, as in the reference forward)
    out = jax.block_until_ready(dot_product_attention(queries, keys, values, valid_lens))
    ref = reference_forward(queries, keys, values, valid_lens)
    assert out.shape == (B, Nq, Dv)
    assert jnp.allclose(out, ref, **TOL)

    # per-query (2-D) valid_lens
    vl2 = jnp.tile(jnp.arange(1, Nq + 1, dtype=jnp.int32)[None, :], (B, 1))
    out2 = jax.block_until_ready(dot_product_attention(queries, keys, values, vl2))
    ref2 = reference_forward(queries, keys, values, vl2)
    assert jnp.allclose(out2, ref2, **TOL)

    # unmasked path (valid_lens=None)
    out3 = jax.block_until_ready(dot_product_attention(queries, keys, values, None))
    ref3 = reference_forward(queries, keys, values, None)
    assert jnp.allclose(out3, ref3, **TOL)

    print("KERNEL_OK")
</pallas_src>

<mosaic_0001>
module attributes {stable_mosaic.version = 11 : i64} {
  func.func @_attention_kernel(%arg0: i32, %arg1: i32, %arg2: i32, %arg3: memref<1x8x16xf32, #tpu.memory_space<vmem>>, %arg4: memref<1x16x16xf32, #tpu.memory_space<vmem>>, %arg5: memref<1x16x20xf32, #tpu.memory_space<vmem>>, %arg6: memref<1x8x1xi32, #tpu.memory_space<vmem>>, %arg7: memref<1x8x20xf32, #tpu.memory_space<vmem>>, %arg8: memref<8x1xf32, #tpu.memory_space<vmem>>, %arg9: memref<8x1xf32, #tpu.memory_space<vmem>>, %arg10: memref<8x20xf32, #tpu.memory_space<vmem>>) attributes {dimension_semantics = [#tpu.dimension_semantics<parallel>, #tpu.dimension_semantics<parallel>, #tpu.dimension_semantics<arbitrary>], iteration_bounds = array<i64: 2, 1, 1>, scalar_prefetch = 0 : i64, scratch_operands = 3 : i64, tpu.core_type = #tpu.core_type<tc>, window_params = [{transform_indices = @transform_0, window_bounds = array<i64: 1, 8, 16>}, {transform_indices = @transform_1, window_bounds = array<i64: 1, 16, 16>}, {transform_indices = @transform_2, window_bounds = array<i64: 1, 16, 20>}, {transform_indices = @transform_3, window_bounds = array<i64: 1, 8, 1>}, {transform_indices = @transform_4, window_bounds = array<i64: 1, 8, 20>}]} {
    %c0_i32 = arith.constant 0 : i32
    %0 = arith.cmpi eq, %arg2, %c0_i32 : i32
    %1 = arith.extui %0 : i1 to i32
    %c0_i32_0 = arith.constant 0 : i32
    %2 = arith.cmpi ne, %1, %c0_i32_0 : i32
    scf.if %2 {
      %cst_32 = arith.constant 0xFF800000 : f32
      %58 = vector.broadcast %cst_32 : f32 to vector<8x1xf32>
      %c0_33 = arith.constant 0 : index
      %c0_34 = arith.constant 0 : index
      %59 = vector.load %arg8[%c0_33, %c0_34] : memref<8x1xf32, #tpu.memory_space<vmem>>, vector<8x1xf32>
      tpu.vector_store %arg8[%c0_33, %c0_34], %58 {strides = array<i32>} : memref<8x1xf32, #tpu.memory_space<vmem>>, vector<8x1xf32>,
      %cst_35 = arith.constant 0.000000e+00 : f32
      %60 = vector.broadcast %cst_35 : f32 to vector<8x1xf32>
      %c0_36 = arith.constant 0 : index
      %c0_37 = arith.constant 0 : index
      %61 = vector.load %arg9[%c0_36, %c0_37] : memref<8x1xf32, #tpu.memory_space<vmem>>, vector<8x1xf32>
      tpu.vector_store %arg9[%c0_36, %c0_37], %60 {strides = array<i32>} : memref<8x1xf32, #tpu.memory_space<vmem>>, vector<8x1xf32>,
      %cst_38 = arith.constant 0.000000e+00 : f32
      %62 = vector.broadcast %cst_38 : f32 to vector<8x20xf32>
      %c0_39 = arith.constant 0 : index
      %c0_40 = arith.constant 0 : index
      %63 = vector.load %arg10[%c0_39, %c0_40] : memref<8x20xf32, #tpu.memory_space<vmem>>, vector<8x20xf32>
      tpu.vector_store %arg10[%c0_39, %c0_40], %62 {strides = array<i32>} : memref<8x20xf32, #tpu.memory_space<vmem>>, vector<8x20xf32>,
    } else {
    }
    %c0 = arith.constant 0 : index
    %c0_1 = arith.constant 0 : index
    %c0_2 = arith.constant 0 : index
    %3 = vector.load %arg3[%c0, %c0_1, %c0_2] : memref<1x8x16xf32, #tpu.memory_space<vmem>>, vector<1x8x16xf32>
    %4 = vector.shape_cast %3 : vector<1x8x16xf32> to vector<8x16xf32>
    %cst = arith.constant 2.500000e-01 : f32
    %5 = vector.broadcast %cst : f32 to vector<8x16xf32>
    %6 = arith.mulf %4, %5 : vector<8x16xf32>
    %7 = arith.truncf %6 : vector<8x16xf32> to vector<8x16xbf16>
    %c0_3 = arith.constant 0 : index
    %c0_4 = arith.constant 0 : index
    %c0_5 = arith.constant 0 : index
    %8 = vector.load %arg4[%c0_3, %c0_4, %c0_5] : memref<1x16x16xf32, #tpu.memory_space<vmem>>, vector<1x16x16xf32>
    %9 = vector.shape_cast %8 : vector<1x16x16xf32> to vector<16x16xf32>
    %10 = arith.truncf %9 : vector<16x16xf32> to vector<16x16xbf16>
    %cst_6 = arith.constant dense<0.000000e+00> : vector<8x16xf32>
    %11 = tpu.matmul %7, %10, %cst_6 {dimension_numbers = #tpu.dot_dimension_numbers<[1], [1], [0], [0], [0, 0, 1, 0], [], []>} : vector<8x16xbf16>, vector<16x16xbf16>, vector<8x16xf32> -> vector<8x16xf32>
    %c0_7 = arith.constant 0 : index
    %c0_8 = arith.constant 0 : index
    %c0_9 = arith.constant 0 : index
    %12 = vector.load %arg6[%c0_7, %c0_8, %c0_9] : memref<1x8x1xi32, #tpu.memory_space<vmem>>, vector<1x8x1xi32>
    %13 = vector.shape_cast %12 : vector<1x8x1xi32> to vector<8x1xi32>
    %14 = tpu.iota {dimensions = array<i32: 1>} : vector<1x16xi32>
    %c16_i32 = arith.constant 16 : i32
    %15 = arith.muli %arg2, %c16_i32 : i32
    %16 = vector.broadcast %15 : i32 to vector<1x16xi32>
    %17 = arith.addi %14, %16 : vector<1x16xi32>
    %18 = vector.broadcast %17 : vector<1x16xi32> to vector<8x16xi32>
    %19 = vector.broadcast %13 : vector<8x1xi32> to vector<8x16xi32>
    %20 = arith.cmpi slt, %18, %19 : vector<8x16xi32>
    %cst_10 = arith.constant -1.000000e+06 : f32
    %21 = vector.broadcast %cst_10 : f32 to vector<8x16xf32>
    %22 = arith.select %20, %11, %21 : vector<8x16xi1>, vector<8x16xf32>
    %c10_i32 = arith.constant 10 : i32
    %23 = vector.broadcast %c10_i32 : i32 to vector<1x16xi32>
    %24 = arith.cmpi slt, %17, %23 : vector<1x16xi32>
    %cst_11 = arith.constant -1.000000e+09 : f32
    %25 = vector.shape_cast %24 : vector<1x16xi1> to vector<1x16xi1>
    %26 = vector.broadcast %25 : vector<1x16xi1> to vector<8x16xi1>
    %27 = vector.broadcast %cst_11 : f32 to vector<8x16xf32>
    %28 = arith.select %26, %22, %27 : vector<8x16xi1>, vector<8x16xf32>
    %c0_12 = arith.constant 0 : index
    %c0_13 = arith.constant 0 : index
    %29 = vector.load %arg8[%c0_12, %c0_13] : memref<8x1xf32, #tpu.memory_space<vmem>>, vector<8x1xf32>
    %cst_14 = arith.constant dense<0xFF800000> : vector<8xf32>
    %30 = vector.multi_reduction <maximumf>, %28, %cst_14 [1] : vector<8x16xf32> to vector<8xf32>
    %31 = vector.shape_cast %30 : vector<8xf32> to vector<8x1xf32>
    %32 = arith.maximumf %29, %31 : vector<8x1xf32>
    %33 = arith.subf %29, %32 : vector<8x1xf32>
    %34 = math.exp %33 : vector<8x1xf32>
    %35 = vector.broadcast %32 : vector<8x1xf32> to vector<8x16xf32>
    %36 = arith.subf %28, %35 : vector<8x16xf32>
    %37 = math.exp %36 : vector<8x16xf32>
    %c0_15 = arith.constant 0 : index
    %c0_16 = arith.constant 0 : index
    %38 = vector.load %arg9[%c0_15, %c0_16] : memref<8x1xf32, #tpu.memory_space<vmem>>, vector<8x1xf32>
    %39 = arith.mulf %34, %38 : vector<8x1xf32>
    %cst_17 = arith.constant dense<0.000000e+00> : vector<8xf32>
    %40 = vector.multi_reduction <add>, %37, %cst_17 [1] : vector<8x16xf32> to vector<8xf32>
    %41 = vector.shape_cast %40 : vector<8xf32> to vector<8x1xf32>
    %42 = arith.addf %39, %41 : vector<8x1xf32>
    %c0_18 = arith.constant 0 : index
    %c0_19 = arith.constant 0 : index
    %43 = vector.load %arg9[%c0_18, %c0_19] : memref<8x1xf32, #tpu.memory_space<vmem>>, vector<8x1xf32>
    tpu.vector_store %arg9[%c0_18, %c0_19], %42 {strides = array<i32>} : memref<8x1xf32, #tpu.memory_space<vmem>>, vector<8x1xf32>,
    %c0_20 = arith.constant 0 : index
    %c0_21 = arith.constant 0 : index
    %44 = vector.load %arg10[%c0_20, %c0_21] : memref<8x20xf32, #tpu.memory_space<vmem>>, vector<8x20xf32>
    %45 = vector.broadcast %34 : vector<8x1xf32> to vector<8x20xf32>
    %46 = arith.mulf %45, %44 : vector<8x20xf32>
    %47 = arith.truncf %37 : vector<8x16xf32> to vector<8x16xbf16>
    %c0_22 = arith.constant 0 : index
    %c0_23 = arith.constant 0 : index
    %c0_24 = arith.constant 0 : index
    %48 = vector.load %arg5[%c0_22, %c0_23, %c0_24] : memref<1x16x20xf32, #tpu.memory_space<vmem>>, vector<1x16x20xf32>
    %49 = vector.shape_cast %48 : vector<1x16x20xf32> to vector<16x20xf32>
    %50 = arith.truncf %49 : vector<16x20xf32> to vector<16x20xbf16>
    %cst_25 = arith.constant dense<0.000000e+00> : vector<8x20xf32>
    %51 = tpu.matmul %47, %50, %cst_25 {dimension_numbers = #tpu.dot_dimension_numbers<[1], [0], [0], [1], [0, 0, 1, 1], [], []>} : vector<8x16xbf16>, vector<16x20xbf16>, vector<8x20xf32> -> vector<8x20xf32>
    %52 = arith.addf %46, %51 : vector<8x20xf32>
    %c0_26 = arith.constant 0 : index
    %c0_27 = arith.constant 0 : index
    %53 = vector.load %arg10[%c0_26, %c0_27] : memref<8x20xf32, #tpu.memory_space<vmem>>, vector<8x20xf32>
    tpu.vector_store %arg10[%c0_26, %c0_27], %52 {strides = array<i32>} : memref<8x20xf32, #tpu.memory_space<vmem>>, vector<8x20xf32>,
    %c0_28 = arith.constant 0 : index
    %c0_29 = arith.constant 0 : index
    %54 = vector.load %arg8[%c0_28, %c0_29] : memref<8x1xf32, #tpu.memory_space<vmem>>, vector<8x1xf32>
    tpu.vector_store %arg8[%c0_28, %c0_29], %32 {strides = array<i32>} : memref<8x1xf32, #tpu.memory_space<vmem>>, vector<8x1xf32>,
    %c0_i32_30 = arith.constant 0 : i32
    %55 = arith.cmpi eq, %arg2, %c0_i32_30 : i32
    %56 = arith.extui %55 : i1 to i32
    %c0_i32_31 = arith.constant 0 : i32
    %57 = arith.cmpi ne, %56, %c0_i32_31 : i32
    scf.if %57 {
      %c0_32 = arith.constant 0 : index
      %c0_33 = arith.constant 0 : index
      %58 = vector.load %arg10[%c0_32, %c0_33] : memref<8x20xf32, #tpu.memory_space<vmem>>, vector<8x20xf32>
      %c0_34 = arith.constant 0 : index
      %c0_35 = arith.constant 0 : index
      %59 = vector.load %arg9[%c0_34, %c0_35] : memref<8x1xf32, #tpu.memory_space<vmem>>, vector<8x1xf32>
      %60 = tpu.reciprocal %59 : vector<8x1xf32> -> vector<8x1xf32>
      %61 = vector.broadcast %60 : vector<8x1xf32> to vector<8x20xf32>
      %62 = arith.mulf %58, %61 : vector<8x20xf32>
      %c0_36 = arith.constant 0 : index
      %c0_37 = arith.constant 0 : index
      %c0_38 = arith.constant 0 : index
      %63 = vector.load %arg7[%c0_36, %c0_37, %c0_38] : memref<1x8x20xf32, #tpu.memory_space<vmem>>, vector<1x8x20xf32>
      %64 = vector.shape_cast %63 : vector<1x8x20xf32> to vector<8x20xf32>
      %65 = vector.shape_cast %62 : vector<8x20xf32> to vector<1x8x20xf32>
      tpu.vector_store %arg7[%c0_36, %c0_37, %c0_38], %65 {strides = array<i32>} : memref<1x8x20xf32, #tpu.memory_space<vmem>>, vector<1x8x20xf32>,
    } else {
    }
    return
  }
  func.func @transform_0(%arg0: i32, %arg1: i32, %arg2: i32) -> (i32, i32, i32) {
    %c0_i32 = arith.constant 0 : i32
    %c0_i32_0 = arith.constant 0 : i32
    return %arg0, %arg1, %c0_i32 : i32, i32, i32
  }
  func.func @transform_1(%arg0: i32, %arg1: i32, %arg2: i32) -> (i32, i32, i32) {
    %c0_i32 = arith.constant 0 : i32
    %c0_i32_0 = arith.constant 0 : i32
    return %arg0, %arg2, %c0_i32 : i32, i32, i32
  }
  func.func @transform_2(%arg0: i32, %arg1: i32, %arg2: i32) -> (i32, i32, i32) {
    %c0_i32 = arith.constant 0 : i32
    %c0_i32_0 = arith.constant 0 : i32
    return %arg0, %arg2, %c0_i32 : i32, i32, i32
  }
  func.func @transform_3(%arg0: i32, %arg1: i32, %arg2: i32) -> (i32, i32, i32) {
    %c0_i32 = arith.constant 0 : i32
    %c0_i32_0 = arith.constant 0 : i32
    return %arg0, %arg1, %c0_i32 : i32, i32, i32
  }
  func.func @transform_4(%arg0: i32, %arg1: i32, %arg2: i32) -> (i32, i32, i32) {
    %c0_i32 = arith.constant 0 : i32
    %c0_i32_0 = arith.constant 0 : i32
    return %arg0, %arg1, %c0_i32 : i32, i32, i32
  }
}

</mosaic_0001>

<llo_original>
// kernel: tpu_custom_call.1
$region0: #{tpu_custom_call.1}
  #allocation0 [shape = 'u32[]', space=smem, size = 0x4, offset = 0x4, fixed_abs, tag = 'smem constant byte address 0x4 - core index']
  #allocation1 [shape = 'u32[144,128]{1,0:T(1,128)}', space=vmem, size = 0x12000, scoped, tag = 'internal scratch']
  #allocation2 [shape = 'f32[8,1]{1,0:T(8,128)}', space=vmem, size = 0x1000, scoped, tag = 'scratch operand']
  #allocation3 [shape = 'f32[8,1]{1,0:T(8,128)}', space=vmem, size = 0x1000, scoped, tag = 'scratch operand']
  #allocation4 [shape = 'f32[8,20]{1,0:T(8,128)}', space=vmem, size = 0x1000, scoped, tag = 'scratch operand']
  %s0 = inlined_call_operand.vmem [shape: f32[2,8,16], index: 0, kind: input, shape index: {}]
  %s1 = inlined_call_operand.hbm [shape: f32[2,16,16], index: 1, kind: input, shape index: {}]
  %s2 = inlined_call_operand.hbm [shape: f32[2,16,20], index: 2, kind: input, shape index: {}]
  %s3 = inlined_call_operand.vmem [shape: s32[2,8,1], index: 3, kind: input, shape index: {}]
  %s4 = inlined_call_operand.hbm [shape: f32[2,8,20], index: 4, kind: output, shape index: {}]
  %s5 = sld [smem:[#allocation0]]
  $region65: #{tpu_custom_call.1} parent=0
    _
  %s7 = ssub.s32 1, %s5
  %s8 = scalar_select 0, %s7, %s5
  $region1: #{tpu_custom_call.1} parent=0
    #allocation5 [shape = 'u8[16384]{0}', space=vmem, size = 0x4000, scoped, tag = 'input window, operand 1']
    #allocation6 [shape = 's32[2]{0}', space=sflag, size = 0x8, scoped, tag = 'scoped memory for tpu_custom_call.1']
    #allocation7 [shape = 's32[2]{0}', space=sflag, size = 0x8, scoped, tag = 'scoped memory for tpu_custom_call.1']
    #allocation8 [shape = 'u8[16384]{0}', space=vmem, size = 0x4000, scoped, tag = 'input window, operand 2']
    #allocation9 [shape = 's32[2]{0}', space=sflag, size = 0x8, scoped, tag = 'scoped memory for tpu_custom_call.1']
    #allocation10 [shape = 'u8[8192]{0}', space=vmem, size = 0x2000, scoped, tag = 'output window, operand 0']
    %9 = vsyncpa [#allocation6], 0
    %s10 = scalar_lea.sflag [#allocation6], 1
    %11 = vsyncpa %s10, 0
    %12 = vsyncpa [#allocation9], 0
    %s13 = scalar_lea.sflag [#allocation9], 1
    %14 = vsyncpa %s13, 0
    %15 = vsyncpa [#allocation7], 0
    %s16 = scalar_lea.sflag [#allocation7], 1
    %17 = vsyncpa %s16, 0
    loop: start=0, step=1, limit=4
    $region2: #{tpu_custom_call.1} parent=1 // loop_pre_header
      _
    $region3: #{tpu_custom_call.1} parent=1 // loop_header
      %s19 = sphi 0, %s23
      %p20 = scmp.ge.s32.totalorder %s19, 4
      %s26 = sphi 0, %s45
      %s27 = sphi 0, %s41
      %s28 = sphi 0, %s37
      %s29 = sphi 0, %s26
      %s30 = sphi 0, %s27
      %s31 = sphi 0, %s28
      %s32 = sphi 0, %s29
      %s33 = sphi 0, %s30
      %s34 = sphi 0, %s31
      %s50 = sphi 0, %s52
      %s53 = sphi 0, %s50
      %s54 = sphi 0, %s53
      %s70 = sphi 0, %s54
      %s78 = sphi 0, %s80
      %s81 = sphi 0, %s78
      %s82 = sphi 0, %s81
      %s98 = sphi 0, %s82
      %s106 = sphi 0, %s108
      %s109 = sphi 0, %s106
      %s110 = sphi 0, %s109
      %s126 = sphi 0, %s110
      %s134 = sphi 0, %s136
      %s137 = sphi 0, %s134
      %s138 = sphi 0, %s137
      %s154 = sphi 0, %s138
      %s162 = sphi 0, %s164
      %s165 = sphi 0, %s162
      %s166 = sphi 0, %s165
      %s182 = sphi 0, %s166
    $region4: #{tpu_custom_call.1} parent=1 // loop_header_branch
      %22 = sbr.rel (%p20) target = $region8
    $region5: #{tpu_custom_call.1} parent=1 // loop_body
      %s24 = ssub.s32 %s19, 1
      %s25 = ssub.s32 %s19, 2
      %s35 = sadd.s32 1, %s28
      %p36 = scmp.ge.s32.totalorder %s35, 1
      %s37 = scalar_select %p36, 0, %s35
      %s38 = sadd.s32 1, %s27
      %s39 = scalar_select %p36, %s38, %s27
      %p40 = scmp.ge.s32.totalorder %s39, 1
      %s41 = scalar_select %p40, 0, %s39
      %s42 = sadd.s32 1, %s26
      %s43 = scalar_select %p40, %s42, %s26
      %p44 = scmp.ge.s32.totalorder %s43, 2
      %s45 = scalar_select %p44, 0, %s43
      %s46 = ssub.s32 %s26, %s45
      %s47 = ssub.s32 %s27, %s41
      %s48 = sor.u32 %s46, %s47
      %p49 = scmp.eq.s32.totalorder %s48, 0
      %s51 = sadd.s32 %s50, 1
      %s52 = scalar_select %p49, %s50, %s51
      %p55 = pneg %p49
      %p56 = scmp.eq.s32.totalorder %s19, 1
      %p57 = por %p55, %p56
      %p58 = scmp.ne.s32.totalorder %s50, %s53
      %p59 = scmp.eq.s32.totalorder %s19, 0
      %p60 = por %p58, %p59
      %p61 = scmp.ne.s32.totalorder %s50, %s53
      %p62 = scmp.eq.s32.totalorder %s24, 1
      %p63 = por %p61, %p62
      %p64 = scmp.ne.s32.totalorder %s53, %s54
      %p65 = scmp.eq.s32.totalorder %s24, 0
      %p66 = por %p64, %p65
      %p67 = scmp.ne.s32.totalorder %s53, %s54
      %p68 = scmp.eq.s32.totalorder %s25, 1
      %p69 = por %p67, %p68
      %p71 = scmp.ne.s32.totalorder %s54, %s70
      %p72 = scmp.eq.s32.totalorder %s25, 0
      %p73 = por %p71, %p72
      %s74 = ssub.s32 %s26, %s45
      %s75 = ssub.s32 %s28, %s37
      %s76 = sor.u32 %s74, %s75
      %p77 = scmp.eq.s32.totalorder %s76, 0
      %s79 = sadd.s32 %s78, 1
      %s80 = scalar_select %p77, %s78, %s79
      %p83 = pneg %p77
      %p84 = scmp.eq.s32.totalorder %s19, 1
      %p85 = por %p83, %p84
      %p86 = scmp.ne.s32.totalorder %s78, %s81
      %p87 = scmp.eq.s32.totalorder %s19, 0
      %p88 = por %p86, %p87
      %p89 = scmp.ne.s32.totalorder %s78, %s81
      %p90 = scmp.eq.s32.totalorder %s24, 1
      %p91 = por %p89, %p90
      %p92 = scmp.ne.s32.totalorder %s81, %s82
      %p93 = scmp.eq.s32.totalorder %s24, 0
      %p94 = por %p92, %p93
      %p95 = scmp.ne.s32.totalorder %s81, %s82
      %p96 = scmp.eq.s32.totalorder %s25, 1
      %p97 = por %p95, %p96
      %p99 = scmp.ne.s32.totalorder %s82, %s98
      %p100 = scmp.eq.s32.totalorder %s25, 0
      %p101 = por %p99, %p100
      %s102 = ssub.s32 %s26, %s45
      %s103 = ssub.s32 %s28, %s37
      %s104 = sor.u32 %s102, %s103
      %p105 = scmp.eq.s32.totalorder %s104, 0
      %s107 = sadd.s32 %s106, 1
      %s108 = scalar_select %p105, %s106, %s107
      %p111 = pneg %p105
      %p112 = scmp.eq.s32.totalorder %s19, 1
      %p113 = por %p111, %p112
      %p114 = scmp.ne.s32.totalorder %s106, %s109
      %p115 = scmp.eq.s32.totalorder %s19, 0
      %p116 = por %p114, %p115
      %p117 = scmp.ne.s32.totalorder %s106, %s109
      %p118 = scmp.eq.s32.totalorder %s24, 1
      %p119 = por %p117, %p118
      %p120 = scmp.ne.s32.totalorder %s109, %s110
      %p121 = scmp.eq.s32.totalorder %s24, 0
      %p122 = por %p120, %p121
      %p123 = scmp.ne.s32.totalorder %s109, %s110
      %p124 = scmp.eq.s32.totalorder %s25, 1
      %p125 = por %p123, %p124
      %p127 = scmp.ne.s32.totalorder %s110, %s126
      %p128 = scmp.eq.s32.totalorder %s25, 0
      %p129 = por %p127, %p128
      %s130 = ssub.s32 %s26, %s45
      %s131 = ssub.s32 %s27, %s41
      %s132 = sor.u32 %s130, %s131
      %p133 = scmp.eq.s32.totalorder %s132, 0
      %s135 = sadd.s32 %s134, 1
      %s136 = scalar_select %p133, %s134, %s135
      %p139 = pneg %p133
      %p140 = scmp.eq.s32.totalorder %s19, 1
      %p141 = por %p139, %p140
      %p142 = scmp.ne.s32.totalorder %s134, %s137
      %p143 = scmp.eq.s32.totalorder %s19, 0
      %p144 = por %p142, %p143
      %p145 = scmp.ne.s32.totalorder %s134, %s137
      %p146 = scmp.eq.s32.totalorder %s24, 1
      %p147 = por %p145, %p146
      %p148 = scmp.ne.s32.totalorder %s137, %s138
      %p149 = scmp.eq.s32.totalorder %s24, 0
      %p150 = por %p148, %p149
      %p151 = scmp.ne.s32.totalorder %s137, %s138
      %p152 = scmp.eq.s32.totalorder %s25, 1
      %p153 = por %p151, %p152
      %p155 = scmp.ne.s32.totalorder %s138, %s154
      %p156 = scmp.eq.s32.totalorder %s25, 0
      %p157 = por %p155, %p156
      %s158 = ssub.s32 %s26, %s45
      %s159 = ssub.s32 %s27, %s41
      %s160 = sor.u32 %s158, %s159
      %p161 = scmp.eq.s32.totalorder %s160, 0
      %s163 = sadd.s32 %s162, 1
      %s164 = scalar_select %p161, %s162, %s163
      %p167 = pneg %p161
      %p168 = scmp.eq.s32.totalorder %s19, 1
      %p169 = por %p167, %p168
      %p170 = scmp.ne.s32.totalorder %s162, %s165
      %p171 = scmp.eq.s32.totalorder %s19, 0
      %p172 = por %p170, %p171
      %p173 = scmp.ne.s32.totalorder %s162, %s165
      %p174 = scmp.eq.s32.totalorder %s24, 1
      %p175 = por %p173, %p174
      %p176 = scmp.ne.s32.totalorder %s165, %s166
      %p177 = scmp.eq.s32.totalorder %s24, 0
      %p178 = por %p176, %p177
      %p179 = scmp.ne.s32.totalorder %s165, %s166
      %p180 = scmp.eq.s32.totalorder %s25, 1
      %p181 = por %p179, %p180
      %p183 = scmp.ne.s32.totalorder %s166, %s182
      %p184 = scmp.eq.s32.totalorder %s25, 0
      %p185 = por %p183, %p184
      %p186 = scmp.le.s32.totalorder 1, %s19
      %p187 = scmp.lt.s32.totalorder %s19, 3
      %p188 = pnand %p186, %p187
      %p189 = pneg %p188
      // Predicated region
      $region9: #{tpu_custom_call.1} parent=5 // pred_check
        _
      $region10: #{tpu_custom_call.1} parent=5 // pred_check_branch
        %191 = sbr.rel (%p188) target = $region12
      $region11: #{tpu_custom_call.1} parent=5 // pred_region
        %s192 = ssub.s32 %s19, 1
      $region12: #{tpu_custom_call.1} parent=5 // pred_fallthru
        _
      %p193 = scmp.lt.s32.totalorder %s19, 2
      // Predicated region
      $region13: #{tpu_custom_call.1} parent=5 // pred_check
        %p194 = pneg %p193
      $region14: #{tpu_custom_call.1} parent=5 // pred_check_branch
        %196 = sbr.rel (%p194) target = $region16
      $region15: #{tpu_custom_call.1} parent=5 // pred_region
        // Predicated region
        $region17: #{tpu_custom_call.1} parent=15 // pred_check
          %p197 = pneg %p60
        $region18: #{tpu_custom_call.1} parent=15 // pred_check_branch
          %199 = sbr.rel (%p197) target = $region20
        $region19: #{tpu_custom_call.1} parent=15 // pred_region
          %p200 = scmp.lt.s32.totalorder %s26, 1
          %s201 = scalar_select %p200, %s26, 1
          %p202 = scmp.lt.s32.totalorder %s27, 0
          %s203 = scalar_select %p202, %s27, 0
          %s204 = sadd.s32 %s203, %s201
          %s205 = smul.addr %s204, 8
          %s206 = scalar_lea.vmem %s0, %s205
        $region20: #{tpu_custom_call.1} parent=15 // pred_fallthru
          _
        // Predicated region
        $region21: #{tpu_custom_call.1} parent=15 // pred_check
          %p207 = pneg %p88
        $region22: #{tpu_custom_call.1} parent=15 // pred_check_branch
          %209 = sbr.rel (%p207) target = $region24
        $region23: #{tpu_custom_call.1} parent=15 // pred_region
          %s210 = sand.u32 %s78, 1
          %s211 = scalar_lea.sflag [#allocation6], %s210
          %s212 = sand.u32 %s78, 1
          %s213 = smul.addr %s212, 16
          %s214 = scalar_lea.vmem [#allocation5], %s213
          %s215 = smul.u32 2, %s28
          %s217 = ssub.s32 256, 256
          %218 = vsyncadd %s211, %s217
          %s219 = smul.addr %s26, 2
          %s220 = sadd.s32 %s215, %s219
          %s221 = smul.addr %s220, 128
          %s222 = scalar_lea.hbm %s1, %s221
          %s223 = sshll.u32 %s214, 4
          %s224 = int_to_ptr.vmem [resolvable:$true] %s223
          %229 = dma.hbm_to_vmem [thread:$0]  %s222, 256, %s224, %s211, 128, 128, 8
        $region24: #{tpu_custom_call.1} parent=15 // pred_fallthru
          _
        // Predicated region
        $region25: #{tpu_custom_call.1} parent=15 // pred_check
          %p230 = pneg %p116
        $region26: #{tpu_custom_call.1} parent=15 // pred_check_branch
          %232 = sbr.rel (%p230) target = $region28
        $region27: #{tpu_custom_call.1} parent=15 // pred_region
          %s233 = sand.u32 %s106, 1
          %s234 = scalar_lea.sflag [#allocation9], %s233
          %s235 = sand.u32 %s106, 1
          %s236 = smul.addr %s235, 16
          %s237 = scalar_lea.vmem [#allocation8], %s236
          %s238 = smul.u32 2, %s28
          %s240 = ssub.s32 256, 256
          %241 = vsyncadd %s234, %s240
          %s242 = smul.addr %s26, 2
          %s243 = sadd.s32 %s238, %s242
          %s244 = smul.addr %s243, 128
          %s245 = scalar_lea.hbm %s2, %s244
          %s246 = sshll.u32 %s237, 4
          %s247 = int_to_ptr.vmem [resolvable:$true] %s246
          %252 = dma.hbm_to_vmem [thread:$0]  %s245, 256, %s247, %s234, 128, 128, 8
        $region28: #{tpu_custom_call.1} parent=15 // pred_fallthru
          _
        // Predicated region
        $region29: #{tpu_custom_call.1} parent=15 // pred_check
          %p253 = pneg %p144
        $region30: #{tpu_custom_call.1} parent=15 // pred_check_branch
          %255 = sbr.rel (%p253) target = $region32
        $region31: #{tpu_custom_call.1} parent=15 // pred_region
          %p256 = scmp.lt.s32.totalorder %s26, 1
          %s257 = scalar_select %p256, %s26, 1
          %p258 = scmp.lt.s32.totalorder %s27, 0
          %s259 = scalar_select %p258, %s27, 0
          %s260 = sadd.s32 %s259, %s257
          %s261 = smul.addr %s260, 8
          %s262 = scalar_lea.vmem %s3, %s261
        $region32: #{tpu_custom_call.1} parent=15 // pred_fallthru
          _
      $region16: #{tpu_custom_call.1} parent=5 // pred_fallthru
        _
      %p263 = scmp.le.s32.totalorder 1, %s19
      %p264 = scmp.lt.s32.totalorder %s19, 3
      %p265 = pnand %p263, %p264
      %p266 = pneg %p265
      // Predicated region
      $region33: #{tpu_custom_call.1} parent=5 // pred_check
        _
      $region34: #{tpu_custom_call.1} parent=5 // pred_check_branch
        %268 = sbr.rel (%p265) target = $region36
      $region35: #{tpu_custom_call.1} parent=5 // pred_region
        %s269 = ssub.s32 %s19, 1
        %s270 = sand.u32 %s81, 1
        %s271 = scalar_lea.sflag [#allocation6], %s270
        %s272 = sand.u32 %s81, 1
        %s273 = smul.addr %s272, 16
        %s274 = scalar_lea.vmem [#allocation5], %s273
        // Predicated region
        $region37: #{tpu_custom_call.1} parent=35 // pred_check
          %p275 = pneg %p94
        $region38: #{tpu_custom_call.1} parent=35 // pred_check_branch
          %277 = sbr.rel (%p275) target = $region40
        $region39: #{tpu_custom_call.1} parent=35 // pred_region
          %278 = dma.done %s271, 256
        $region40: #{tpu_custom_call.1} parent=35 // pred_fallthru
          _
        %s279 = sand.u32 %s109, 1
        %s280 = scalar_lea.sflag [#allocation9], %s279
        %s281 = sand.u32 %s109, 1
        %s282 = smul.addr %s281, 16
        %s283 = scalar_lea.vmem [#allocation8], %s282
        // Predicated region
        $region41: #{tpu_custom_call.1} parent=35 // pred_check
          %p284 = pneg %p122
        $region42: #{tpu_custom_call.1} parent=35 // pred_check_branch
          %286 = sbr.rel (%p284) target = $region44
        $region43: #{tpu_custom_call.1} parent=35 // pred_region
          %287 = dma.done %s280, 256
        $region44: #{tpu_custom_call.1} parent=35 // pred_fallthru
          _
        %p288 = scmp.lt.s32.totalorder %s29, 1
        %s289 = scalar_select %p288, %s29, 1
        %p290 = scmp.lt.s32.totalorder %s30, 0
        %s291 = scalar_select %p290, %s30, 0
        %s292 = sadd.s32 %s291, %s289
        %s293 = smul.addr %s292, 8
        %s294 = scalar_lea.vmem %s0, %s293
        %p295 = pneg %p66
        %p296 = pneg %p63
        %s297 = sand.u32 %s81, 1
        %s298 = scalar_lea.sflag [#allocation6], %s297
        %s299 = sand.u32 %s81, 1
        %s300 = smul.addr %s299, 16
        %s301 = scalar_lea.vmem [#allocation5], %s300
        %p302 = pneg %p94
        %p303 = pneg %p91
        %s304 = sand.u32 %s109, 1
        %s305 = scalar_lea.sflag [#allocation9], %s304
        %s306 = sand.u32 %s109, 1
        %s307 = smul.addr %s306, 16
        %s308 = scalar_lea.vmem [#allocation8], %s307
        %p309 = pneg %p122
        %p310 = pneg %p119
        %p311 = scmp.lt.s32.totalorder %s29, 1
        %s312 = scalar_select %p311, %s29, 1
        %p313 = scmp.lt.s32.totalorder %s30, 0
        %s314 = scalar_select %p313, %s30, 0
        %s315 = sadd.s32 %s314, %s312
        %s316 = smul.addr %s315, 8
        %s317 = scalar_lea.vmem %s3, %s316
        %p318 = pneg %p150
        %p319 = pneg %p147
        %p320 = pneg %p178
        %p321 = pneg %p175
        %s322 = sand.u32 %s165, 1
        %s323 = scalar_lea.sflag [#allocation7], %s322
        %s324 = sand.u32 %s165, 1
        %s325 = smul.addr %s324, 8
        %s326 = scalar_lea.vmem [#allocation10], %s325
        %p327 = scmp.lt.s32.totalorder %s29, 1
        %s328 = scalar_select %p327, %s29, 1
        %p329 = scmp.lt.s32.totalorder %s30, 0
        %s330 = scalar_select %p329, %s30, 0
        %s331 = sadd.s32 %s330, %s328
        %s332 = smul.addr %s331, 8
        %s333 = scalar_lea.vmem %s0, %s332
        %s334 = smul.u32 2, %s31
        %s335 = smul.u32 2, %s31
        %p336 = scmp.lt.s32.totalorder %s29, 1
        %s337 = scalar_select %p336, %s29, 1
        %p338 = scmp.lt.s32.totalorder %s30, 0
        %s339 = scalar_select %p338, %s30, 0
        %s340 = sadd.s32 %s339, %s337
        %s341 = smul.addr %s340, 8
        %s342 = scalar_lea.vmem %s3, %s341
        %p344 = scmp.eq.s32.totalorder %s31, 0
        // Predicated region
        $region45: #{tpu_custom_call.1} parent=35 // pred_check
          %p345 = pneg %p344
        $region46: #{tpu_custom_call.1} parent=35 // pred_check_branch
          %347 = sbr.rel (%p345) target = $region48
        $region47: #{tpu_custom_call.1} parent=35 // pred_region
          %vm348 = vcmask 7168
          %349 = vst.msk [vmem:[#allocation2] sm:$0xff] %vm348, -inf
          %350 = vst.msk [vmem:[#allocation3] sm:$0xff] %vm348, 0.0
          %vm351 = vcmask 162816
          %352 = vst.msk [vmem:[#allocation4] sm:$0xff] %vm351, 0.0
        $region48: #{tpu_custom_call.1} parent=35 // pred_fallthru
          _
        %v353 = vld [vmem:[%s333] sm:$0xff]
        %v354 = vmul.f32 %v353, 0.25
        %v355 = vpack.c.bf16 %v354, %v354
        %v356 = vld [vmem:[%s274] sm:$0xff]
        %v357 = vld [vmem:[%s274 + $0x8] sm:$0xff]
        %v358 = vpack.c.bf16 %v357, %v356
        %vm359 = vcmask 130048
        %v361 = vsel %vm359, %v355, 0
        %v364 = vsel %vm359, %v358, 0
        %366 = vmatprep.subr.bf16.mxu0 0
        %367 = vmatpush1.bf16.xpose.msra.mxu0 0
        %368 = vmatprep.subr.bf16.mxu0 0
        %369 = vmatpush1.bf16.xpose.msra.mxu0 0
        %370 = vmatprep.subr.bf16.mxu0 0
        %371 = vmatpush1.bf16.xpose.msra.mxu0 0
        %372 = vmatprep.subr.bf16.mxu0 0
        %373 = vmatpush1.bf16.xpose.msra.mxu0 0
        %374 = vmatprep.subr.bf16.mxu0 0
        %375 = vmatpush1.bf16.xpose.msra.mxu0 0
        %376 = vmatprep.subr.bf16.mxu0 0
        %377 = vmatpush1.bf16.xpose.msra.mxu0 0
        %378 = vmatprep.subr.bf16.mxu0 0
        %379 = vmatpush1.bf16.xpose.msra.mxu0 0
        %380 = vmatprep.subr.bf16.mxu0 0
        %381 = vmatpush1.bf16.xpose.msra.mxu0 %v364
        %382 = vmatprep.subr.bf16.mxu0 0
        %383 = vmatpush2.bf16.xpose.msra.mxu0 0
        %384 = vmatprep.subr.bf16.mxu0 0
        %385 = vmatpush2.bf16.xpose.msra.mxu0 0
        %386 = vmatprep.subr.bf16.mxu0 0
        %387 = vmatpush2.bf16.xpose.msra.mxu0 0
        %388 = vmatprep.subr.bf16.mxu0 0
        %389 = vmatpush2.bf16.xpose.msra.mxu0 0
        %390 = vmatprep.subr.bf16.mxu0 0
        %391 = vmatpush2.bf16.xpose.msra.mxu0 0
        %392 = vmatprep.subr.bf16.mxu0 0
        %393 = vmatpush2.bf16.xpose.msra.mxu0 0
        %394 = vmatprep.subr.bf16.mxu0 0
        %395 = vmatpush2.bf16.xpose.msra.mxu0 0
        %396 = vmatprep.subr.bf16.mxu0 0
        %397 = vmatpush2.bf16.xpose.msra.mxu0 0
        %398 = vmatprep.mubr.bf16.mxu0 0
        %399 = vmatmul.mubr.bf16.gmra.mxu0 %v361
        %v400 = vpop.f32.mrf.mxu0
        %v401 = vadd.f32 0.0, %v400
        %v402 = vpop.f32.mrf.mxu0
        %v403 = vpop.f32.mrf.mxu0
        %v404 = vpop.f32.mrf.mxu0
        %405 = vdwg.mxu0
        %v406 = vld [vmem:[%s342] sm:$0xff]
        %v407 = vlaneseq
        %v408 = vand.u32 %v407, 127
        %s409 = smul.u32 %s31, 16
        %v410 = vstv %s409
        %v411 = vadd.s32 %v408, %v410
        %412 = vset.pattern.permute.xlu0 0
        %413 = vperm.xlu0 %412, %v406
        %v414 = vpop.permute.xlu0 %413
        %vm415 = vcmp.lt.s32.totalorder %v411, %v414
        %v416 = vsel %vm415, %v401, -1000000.0
        %vm417 = vcmp.lt.s32.totalorder %v411, 10
        %v418 = vsel %vm417, 1, 0
        %vm419 = vcmp.eq.s32.totalorder %v418, 1
        %v420 = vsel %vm419, %v416, -1e+09
        %v421 = vld [vmem:[#allocation2] sm:$0xff]
        %v422 = vsel %vm359, %v420, -inf
        %423 = vmax.xlane.f32.xlu0 %v422
        %v424 = vpop.xlane.xlu0 %423
        %v425 = vmax.f32 %v421, %v424
        %v426 = vsub.f32 %v421, %v425
        %v427 = vmul.f32 %v426, 1.442695
        %v428 = vpow.pop %v427
        %430 = vset.pattern.permute.xlu0 0
        %431 = vperm.xlu0 %430, %v425
        %v432 = vpop.permute.xlu0 %431
        %v434 = vsub.f32 %v420, %v432
        %v435 = vmul.f32 %v434, 1.442695
        %v436 = vpow.pop %v435
        %v437 = vld [vmem:[#allocation3] sm:$0xff]
        %v438 = vmul.f32 %v428, %v437
        %v439 = vsel %vm359, %v436, 0.0
        %440 = vadd.xlane.f32.xlu0 %v439
        %v441 = vpop.xlane.xlu0 %440
        %v442 = vadd.f32 %v438, %v441
        %vm443 = vcmask 7168
        %444 = vst.msk [vmem:[#allocation3] sm:$0xff] %vm443, %v442
        %v445 = vld [vmem:[#allocation4] sm:$0xff]
        %447 = vset.pattern.permute.xlu0 0
        %448 = vperm.xlu0 %447, %v428
        %v449 = vpop.permute.xlu0 %448
        %v451 = vmul.f32 %v449, %v445
        %v452 = vpack.c.bf16 %v436, %v436
        %v453 = vld [vmem:[%s283] sm:$0xff]
        %v454 = vld [vmem:[%s283 + $0x8] sm:$0xff]
        %v455 = vpack.c.bf16 %v454, %v453
        %v457 = vsel %vm359, %v452, 0
        %459 = vmatprep.subr.bf16.mxu0 0
        %460 = vmatpush1.bf16.msra.mxu0 0
        %461 = vmatprep.subr.bf16.mxu0 0
        %462 = vmatpush1.bf16.msra.mxu0 0
        %463 = vmatprep.subr.bf16.mxu0 0
        %464 = vmatpush1.bf16.msra.mxu0 0
        %465 = vmatprep.subr.bf16.mxu0 0
        %466 = vmatpush1.bf16.msra.mxu0 0
        %467 = vmatprep.subr.bf16.mxu0 0
        %468 = vmatpush1.bf16.msra.mxu0 0
        %469 = vmatprep.subr.bf16.mxu0 0
        %470 = vmatpush1.bf16.msra.mxu0 0
        %471 = vmatprep.subr.bf16.mxu0 0
        %472 = vmatpush1.bf16.msra.mxu0 0
        %473 = vmatprep.subr.bf16.mxu0 0
        %474 = vmatpush1.bf16.msra.mxu0 %v455
        %475 = vmatprep.subr.bf16.mxu0 0
        %476 = vmatpush2.bf16.msra.mxu0 0
        %477 = vmatprep.subr.bf16.mxu0 0
        %478 = vmatpush2.bf16.msra.mxu0 0
        %479 = vmatprep.subr.bf16.mxu0 0
        %480 = vmatpush2.bf16.msra.mxu0 0
        %481 = vmatprep.subr.bf16.mxu0 0
        %482 = vmatpush2.bf16.msra.mxu0 0
        %483 = vmatprep.subr.bf16.mxu0 0
        %484 = vmatpush2.bf16.msra.mxu0 0
        %485 = vmatprep.subr.bf16.mxu0 0
        %486 = vmatpush2.bf16.msra.mxu0 0
        %487 = vmatprep.subr.bf16.mxu0 0
        %488 = vmatpush2.bf16.msra.mxu0 0
        %489 = vmatprep.subr.bf16.mxu0 0
        %490 = vmatpush2.bf16.msra.mxu0 0
        %491 = vmatprep.mubr.bf16.mxu0 0
        %492 = vmatmul.mubr.bf16.gmra.mxu0 %v457
        %v493 = vpop.f32.mrf.mxu0
        %v494 = vadd.f32 0.0, %v493
        %v495 = vpop.f32.mrf.mxu0
        %v496 = vpop.f32.mrf.mxu0
        %v497 = vpop.f32.mrf.mxu0
        %498 = vdwg.mxu0
        %v499 = vadd.f32 %v451, %v494
        %vm500 = vcmask 162816
        %501 = vst.msk [vmem:[#allocation4] sm:$0xff] %vm500, %v499
        %502 = vst.msk [vmem:[#allocation2] sm:$0xff] %vm443, %v425
        // Predicated region
        $region49: #{tpu_custom_call.1} parent=35 // pred_check
          %p503 = pneg %p344
        $region50: #{tpu_custom_call.1} parent=35 // pred_check_branch
          %505 = sbr.rel (%p503) target = $region52
        $region51: #{tpu_custom_call.1} parent=35 // pred_region
          %v506 = vld [vmem:[#allocation4] sm:$0xff]
          %v507 = vld [vmem:[#allocation3] sm:$0xff]
          %v508 = vrcp.pop %v507
          %510 = vset.pattern.permute.xlu0 0
          %511 = vperm.xlu0 %510, %v508
          %v512 = vpop.permute.xlu0 %511
          %v514 = vmul.f32 %v506, %v512
          %515 = vst.msk [vmem:[%s326] sm:$0xff] %vm500, %v514
        $region52: #{tpu_custom_call.1} parent=35 // pred_fallthru
          _
        %s516 = sand.u32 %s165, 1
        %s517 = scalar_lea.sflag [#allocation7], %s516
        %s518 = sand.u32 %s165, 1
        %s519 = smul.addr %s518, 8
        %s520 = scalar_lea.vmem [#allocation10], %s519
        // Predicated region
        $region53: #{tpu_custom_call.1} parent=35 // pred_check
          %p521 = pneg %p175
        $region54: #{tpu_custom_call.1} parent=35 // pred_check_branch
          %523 = sbr.rel (%p521) target = $region56
        $region55: #{tpu_custom_call.1} parent=35 // pred_region
          %s525 = ssub.s32 128, 128
          %526 = vsyncadd %s517, %s525
          %s527 = sadd.s32 %s30, %s29
          %s528 = smul.addr %s527, 128
          %s529 = scalar_lea.hbm %s4, %s528
          %s531 = sshll.u32 %s520, 4
          %s532 = int_to_ptr.vmem [resolvable:$true] %s531
          %534 = dma.vmem_to_hbm [thread:$0]  %s532, 128, %s529, %s517
        $region56: #{tpu_custom_call.1} parent=35 // pred_fallthru
          _
      $region36: #{tpu_custom_call.1} parent=5 // pred_fallthru
        _
      %p535 = scmp.le.s32.totalorder 2, %s19
      // Predicated region
      $region57: #{tpu_custom_call.1} parent=5 // pred_check
        %p536 = pneg %p535
      $region58: #{tpu_custom_call.1} parent=5 // pred_check_branch
        %538 = sbr.rel (%p536) target = $region60
      $region59: #{tpu_custom_call.1} parent=5 // pred_region
        %s539 = ssub.s32 %s19, 2
        // Predicated region
        $region61: #{tpu_custom_call.1} parent=59 // pred_check
          %p540 = pneg %p181
        $region62: #{tpu_custom_call.1} parent=59 // pred_check_branch
          %542 = sbr.rel (%p540) target = $region64
        $region63: #{tpu_custom_call.1} parent=59 // pred_region
          %s543 = sand.u32 %s166, 1
          %s544 = scalar_lea.sflag [#allocation7], %s543
          %s545 = sand.u32 %s166, 1
          %s546 = smul.addr %s545, 8
          %s547 = scalar_lea.vmem [#allocation10], %s546
          %548 = dma.done %s544, 128
        $region64: #{tpu_custom_call.1} parent=59 // pred_fallthru
          _
      $region60: #{tpu_custom_call.1} parent=5 // pred_fallthru
        _
    $region6: #{tpu_custom_call.1} parent=1 // loop_footer
      %s23 = sadd.s32 1, %s19
    $region7: #{tpu_custom_call.1} parent=1 // loop_footer_branch
      %18 = sbr.rel target = $region3
    $region8: #{tpu_custom_call.1} parent=1 // loop_exit
      _
    %549 = vsyncpa [#allocation6], 1
    %s550 = scalar_lea.sflag [#allocation6], 1
    %551 = vsyncpa %s550, 1
    %552 = vsyncpa [#allocation9], 1
    %s553 = scalar_lea.sflag [#allocation9], 1
    %554 = vsyncpa %s553, 1
    %555 = vsyncpa [#allocation7], 1
    %s556 = scalar_lea.sflag [#allocation7], 1
    %557 = vsyncpa %s556, 1

</llo_original>
